<compile_context>
chip_gen: v5e
topology: v5e:2x2
jax: 0.10.0
libtpu: 0.0.40
codegen_flags: <defaults>
</compile_context>

<pallas_src>
import numpy as np
import jax
import jax.numpy as jnp
from jax.experimental import pallas as pl
from jax.experimental.pallas import tpu as pltpu


def _linear_interp_matrix(out_size: int, in_size: int) -> np.ndarray:
    """Dense (out_size, in_size) matrix reproducing PyTorch's linear interpolation
    along one axis with align_corners=False (nn.Upsample default). Rows sum to 1."""
    scale = in_size / out_size
    o = np.arange(out_size, dtype=np.float64)
    src = (o + 0.5) * scale - 0.5
    src = np.maximum(src, 0.0)
    i0 = np.minimum(np.floor(src).astype(np.int64), in_size - 1)
    i1 = np.minimum(i0 + 1, in_size - 1)
    w1 = src - i0
    w0 = 1.0 - w1
    m = np.zeros((out_size, in_size), dtype=np.float64)
    np.add.at(m, (np.arange(out_size), i0), w0)
    np.add.at(m, (np.arange(out_size), i1), w1)
    return m.astype(np.float32)


def _pick_tile(total: int, align: int, cap: int) -> int:
    """Largest divisor of `total` that is a multiple of `align` and <= cap (fallback: full dim)."""
    best = 0
    t = align
    limit = min(cap, total)
    while t <= limit:
        if total % t == 0:
            best = t
        t += align
    return best if best > 0 else total


def _vmem_limit_bytes() -> int:
    """Per-chip scoped VMEM budget: ~70% of physical, capped at 96 MiB.
    -> ~90 MiB on v5e/v6e (128 MiB physical), ~45 MiB on v7x (64 MiB physical)."""
    try:
        phys = int(pltpu.get_tpu_info().vmem_capacity_bytes)
    except Exception:
        phys = 64 * 1024 * 1024  # conservative fallback (v7x-sized)
    return min(96 * 1024 * 1024, int(phys * 0.7))


# ---------------------------------------------------------------------------
# Fused kernel: (conv1x1x1 + D-interp + bias) -> W-interp -> H-interp -> sigmoid
# Three flat 2-D MXU matmuls, f32 accumulation, no reshapes, no broadcasts.
# ---------------------------------------------------------------------------
def _fused_kernel(x_ref, a_ref, bias_ref, s_ref, bmat_ref, o_ref):
    # x_ref:    (r_in,  hw_in)   bf16   per-batch input slab, columns = flattened (Hin, Win)
    # a_ref:    (tm,    r_in)    bf16   kron(conv_weight, Md) row tile
    # bias_ref: (tm,    1)       f32    conv bias repeated per Dout
    # s_ref:    (hw_in, hw_mid)  bf16   kron(I_Hin, Mw^T)      (W-interp, block-diagonal)
    # bmat_ref: (hw_mid, hw_out) bf16   kron(Mh^T, I_Wout)     (H-interp, block-structured)
    # o_ref:    (tm,    hw_out)  f32    lane-dense output slab, columns = flattened (Hout, Wout)
    y = jnp.dot(a_ref[...], x_ref[...], preferred_element_type=jnp.float32) + bias_ref[...]
    yw = jnp.dot(y.astype(jnp.bfloat16), s_ref[...], preferred_element_type=jnp.float32)
    z = jnp.dot(yw.astype(jnp.bfloat16), bmat_ref[...], preferred_element_type=jnp.float32)
    # sigmoid(z) == 0.5 * tanh(0.5 * z) + 0.5  -> single EUP push per vreg
    o_ref[...] = (0.5 * jnp.tanh(0.5 * z) + 0.5).astype(o_ref.dtype)


def output_resize_head(x, conv_weight, conv_bias, out_size):
    """x: (N, C_in, D, H, W) f32; conv_weight: (C_out, C_in, 1, 1, 1); conv_bias: (C_out,)."""
    N, C_in, Din, Hin, Win = x.shape
    C_out = conv_weight.shape[0]
    Dout, Hout, Wout = out_size
    r_in, r_out = C_in * Din, C_out * Dout
    hw_in, hw_mid, hw_out = Hin * Win, Hin * Wout, Hout * Wout

    # ---- parameter glue (tiny, host/plain-JAX constants) ----
    wc = conv_weight.reshape(C_out, C_in).astype(jnp.float32)
    md = _linear_interp_matrix(Dout, Din)
    mh = _linear_interp_matrix(Hout, Hin)
    mw = _linear_interp_matrix(Wout, Win)

    a_mat = jnp.kron(wc, jnp.asarray(md)).astype(jnp.bfloat16)                     # (r_out, r_in)
    bias_col = jnp.repeat(conv_bias.astype(jnp.float32), Dout)[:, None]            # (r_out, 1)
    # Block-structured separable H/W interp operands (exact: rows of mh/mw sum to 1).
    s_mat = jnp.asarray(np.kron(np.eye(Hin, dtype=np.float32), mw.T)).astype(jnp.bfloat16)   # (hw_in, hw_mid)
    b_mat = jnp.asarray(np.kron(mh.T, np.eye(Wout, dtype=np.float32))).astype(jnp.bfloat16)  # (hw_mid, hw_out)

    # free metadata reshape: rows = (C_in outer, Din inner), cols = (Hin outer, Win inner)
    x2 = x.astype(jnp.bfloat16).reshape(N, r_in, hw_in)

    # ---- tiling ----
    # Keep A fully resident for small heads (typical); otherwise tile rows in bf16-friendly multiples.
    tm = r_out if r_out <= 256 else _pick_tile(r_out, 16, 256)
    grid = (N, r_out // tm)
    vmem_limit = _vmem_limit_bytes()

    # Rough double-buffered working-set estimate (lane-padded where it matters).
    est = 2 * (r_in * max(hw_in, 128) * 2 + tm * r_in * 2 + tm * 128 * 4
               + hw_in * hw_mid * 2 + hw_mid * hw_out * 2 + tm * hw_out * 4)
    # TODO(synk): for very large spatial sizes (per-batch X slab or the kron(I,Mw^T)/kron(Mh^T,I)
    # operands exceeding the VMEM budget) fall back to a 2-stage separable pipeline tiled over Hout.
    if est > vmem_limit:
        raise ValueError(f"fused OutputResizeHead tile estimate {est} B exceeds VMEM budget {vmem_limit} B")

    out = pl.pallas_call(
        _fused_kernel,
        out_shape=jax.ShapeDtypeStruct((N, r_out, hw_out), jnp.float32),
        grid_spec=pltpu.PrefetchScalarGridSpec(
            num_scalar_prefetch=0,
            grid=grid,
            in_specs=[
                # X block index is constant across the (inner) row-tile axis -> DMA'd once per batch.
                pl.BlockSpec((pl.Squeezed(), r_in, hw_in), lambda n, i: (n, 0, 0)),
                pl.BlockSpec((tm, r_in), lambda n, i: (i, 0)),
                pl.BlockSpec((tm, 1), lambda n, i: (i, 0)),
                pl.BlockSpec((hw_in, hw_mid), lambda n, i: (0, 0)),
                pl.BlockSpec((hw_mid, hw_out), lambda n, i: (0, 0)),
            ],
            out_specs=pl.BlockSpec((pl.Squeezed(), tm, hw_out), lambda n, i: (n, i, 0)),
        ),
        compiler_params=pltpu.CompilerParams(
            dimension_semantics=("parallel", "arbitrary"),
            vmem_limit_bytes=vmem_limit,
        ),
    )(x2, a_mat, bias_col, s_mat, b_mat)

    # free metadata reshape back to NCDHW  (PyTorch module returns f32; keep f32 output)
    return out.reshape(N, C_out, Dout, Hout, Wout)


def _reference_forward(x, conv_weight, conv_bias, out_size):
    """Pure-JAX f32 reference: conv3d(k=1) -> trilinear upsample -> sigmoid."""
    C_out = conv_weight.shape[0]
    C_in = conv_weight.shape[1]
    Dout, Hout, Wout = out_size
    _, _, Din, Hin, Win = x.shape
    wc = conv_weight.reshape(C_out, C_in)
    y = jnp.einsum('oc,ncdhw->nodhw', wc, x) + conv_bias[None, :, None, None, None]
    md = jnp.asarray(_linear_interp_matrix(Dout, Din))
    mh = jnp.asarray(_linear_interp_matrix(Hout, Hin))
    mw = jnp.asarray(_linear_interp_matrix(Wout, Win))
    y = jnp.einsum('Dd,ncdhw->ncDhw', md, y)
    y = jnp.einsum('Hh,ncdhw->ncdHw', mh, y)
    y = jnp.einsum('Ww,ncdhw->ncdhW', mw, y)
    return jax.nn.sigmoid(y)


if __name__ == "__main__":
    # Small shapes: batch=2, in_channels=4, out_channels=3,
    # input spatial (4, 8, 8), out_size (8, 16, 16).
    N, C_in, C_out = 2, 4, 3
    in_spatial = (4, 8, 8)
    out_size = (8, 16, 16)

    key = jax.random.PRNGKey(0)
    kx, kw, kb = jax.random.split(key, 3)
    x = jax.random.normal(kx, (N, C_in) + in_spatial, dtype=jnp.float32)
    conv_weight = 0.2 * jax.random.normal(kw, (C_out, C_in, 1, 1, 1), dtype=jnp.float32)
    conv_bias = 0.1 * jax.random.normal(kb, (C_out,), dtype=jnp.float32)

    out = output_resize_head(x, conv_weight, conv_bias, out_size)
    out = jax.block_until_ready(out)

    ref = _reference_forward(x, conv_weight, conv_bias, out_size)
    assert out.shape == (N, C_out) + out_size
    # bf16 MXU operands give ~1e-3 abs error on sigmoid outputs; real layout/plumbing
    # bugs show up as O(0.1) errors, so 2e-2 still catches them.
    max_err = float(jnp.max(jnp.abs(out - ref)))
    assert max_err < 2e-2, f"mismatch vs reference: {max_err}"
    print("KERNEL_OK")
</pallas_src>

<mosaic_0001>
module attributes {stable_mosaic.version = 11 : i64} {
  func.func @_fused_kernel(%arg0: i32, %arg1: i32, %arg2: memref<1x16x64xbf16, #tpu.memory_space<vmem>>, %arg3: memref<24x16xbf16, #tpu.memory_space<vmem>>, %arg4: memref<24x1xf32, #tpu.memory_space<vmem>>, %arg5: memref<64x128xbf16, #tpu.memory_space<vmem>>, %arg6: memref<128x256xbf16, #tpu.memory_space<vmem>>, %arg7: memref<1x24x256xf32, #tpu.memory_space<vmem>>) attributes {dimension_semantics = [#tpu.dimension_semantics<parallel>, #tpu.dimension_semantics<arbitrary>], iteration_bounds = array<i64: 2, 1>, scalar_prefetch = 0 : i64, scratch_operands = 0 : i64, tpu.core_type = #tpu.core_type<tc>, window_params = [{transform_indices = @transform_0, window_bounds = array<i64: 1, 16, 64>}, {transform_indices = @transform_1, window_bounds = array<i64: 24, 16>}, {transform_indices = @transform_2, window_bounds = array<i64: 24, 1>}, {pipeline_mode = #tpu.pipeline_mode<synchronous>, transform_indices = @transform_3, window_bounds = array<i64: 64, 128>}, {pipeline_mode = #tpu.pipeline_mode<synchronous>, transform_indices = @transform_4, window_bounds = array<i64: 128, 256>}, {transform_indices = @transform_5, window_bounds = array<i64: 1, 24, 256>}]} {
    %c0 = arith.constant 0 : index
    %c0_0 = arith.constant 0 : index
    %0 = vector.load %arg3[%c0, %c0_0] : memref<24x16xbf16, #tpu.memory_space<vmem>>, vector<24x16xbf16>
    %c0_1 = arith.constant 0 : index
    %c0_2 = arith.constant 0 : index
    %c0_3 = arith.constant 0 : index
    %1 = vector.load %arg2[%c0_1, %c0_2, %c0_3] : memref<1x16x64xbf16, #tpu.memory_space<vmem>>, vector<1x16x64xbf16>
    %2 = vector.shape_cast %1 : vector<1x16x64xbf16> to vector<16x64xbf16>
    %cst = arith.constant dense<0.000000e+00> : vector<24x64xf32>
    %3 = tpu.matmul %0, %2, %cst {dimension_numbers = #tpu.dot_dimension_numbers<[1], [0], [0], [1], [0, 0, 1, 1], [], []>} : vector<24x16xbf16>, vector<16x64xbf16>, vector<24x64xf32> -> vector<24x64xf32>
    %c0_4 = arith.constant 0 : index
    %c0_5 = arith.constant 0 : index
    %4 = vector.load %arg4[%c0_4, %c0_5] : memref<24x1xf32, #tpu.memory_space<vmem>>, vector<24x1xf32>
    %5 = vector.broadcast %4 : vector<24x1xf32> to vector<24x64xf32>
    %6 = arith.addf %3, %5 : vector<24x64xf32>
    %7 = arith.truncf %6 : vector<24x64xf32> to vector<24x64xbf16>
    %c0_6 = arith.constant 0 : index
    %c0_7 = arith.constant 0 : index
    %8 = vector.load %arg5[%c0_6, %c0_7] : memref<64x128xbf16, #tpu.memory_space<vmem>>, vector<64x128xbf16>
    %cst_8 = arith.constant dense<0.000000e+00> : vector<24x128xf32>
    %9 = tpu.matmul %7, %8, %cst_8 {dimension_numbers = #tpu.dot_dimension_numbers<[1], [0], [0], [1], [0, 0, 1, 1], [], []>} : vector<24x64xbf16>, vector<64x128xbf16>, vector<24x128xf32> -> vector<24x128xf32>
    %10 = arith.truncf %9 : vector<24x128xf32> to vector<24x128xbf16>
    %c0_9 = arith.constant 0 : index
    %c0_10 = arith.constant 0 : index
    %11 = vector.load %arg6[%c0_9, %c0_10] : memref<128x256xbf16, #tpu.memory_space<vmem>>, vector<128x256xbf16>
    %cst_11 = arith.constant dense<0.000000e+00> : vector<24x256xf32>
    %12 = tpu.matmul %10, %11, %cst_11 {dimension_numbers = #tpu.dot_dimension_numbers<[1], [0], [0], [1], [0, 0, 1, 1], [], []>} : vector<24x128xbf16>, vector<128x256xbf16>, vector<24x256xf32> -> vector<24x256xf32>
    %cst_12 = arith.constant 5.000000e-01 : f32
    %13 = vector.broadcast %cst_12 : f32 to vector<24x256xf32>
    %14 = arith.mulf %13, %12 : vector<24x256xf32>
    %15 = math.tanh %14 : vector<24x256xf32>
    %cst_13 = arith.constant 5.000000e-01 : f32
    %16 = vector.broadcast %cst_13 : f32 to vector<24x256xf32>
    %17 = arith.mulf %16, %15 : vector<24x256xf32>
    %cst_14 = arith.constant 5.000000e-01 : f32
    %18 = vector.broadcast %cst_14 : f32 to vector<24x256xf32>
    %19 = arith.addf %17, %18 : vector<24x256xf32>
    %c0_15 = arith.constant 0 : index
    %c0_16 = arith.constant 0 : index
    %c0_17 = arith.constant 0 : index
    %20 = vector.load %arg7[%c0_15, %c0_16, %c0_17] : memref<1x24x256xf32, #tpu.memory_space<vmem>>, vector<1x24x256xf32>
    %21 = vector.shape_cast %20 : vector<1x24x256xf32> to vector<24x256xf32>
    %22 = vector.shape_cast %19 : vector<24x256xf32> to vector<1x24x256xf32>
    tpu.vector_store %arg7[%c0_15, %c0_16, %c0_17], %22 {strides = array<i32>} : memref<1x24x256xf32, #tpu.memory_space<vmem>>, vector<1x24x256xf32>,
    return
  }
  func.func @transform_0(%arg0: i32, %arg1: i32) -> (i32, i32, i32) {
    %c0_i32 = arith.constant 0 : i32
    %c0_i32_0 = arith.constant 0 : i32
    %c0_i32_1 = arith.constant 0 : i32
    return %arg0, %c0_i32, %c0_i32_0 : i32, i32, i32
  }
  func.func @transform_1(%arg0: i32, %arg1: i32) -> (i32, i32) {
    %c0_i32 = arith.constant 0 : i32
    %c0_i32_0 = arith.constant 0 : i32
    return %arg1, %c0_i32 : i32, i32
  }
  func.func @transform_2(%arg0: i32, %arg1: i32) -> (i32, i32) {
    %c0_i32 = arith.constant 0 : i32
    %c0_i32_0 = arith.constant 0 : i32
    return %arg1, %c0_i32 : i32, i32
  }
  func.func @transform_3(%arg0: i32, %arg1: i32) -> (i32, i32) {
    %c0_i32 = arith.constant 0 : i32
    %c0_i32_0 = arith.constant 0 : i32
    %c0_i32_1 = arith.constant 0 : i32
    return %c0_i32, %c0_i32_0 : i32, i32
  }
  func.func @transform_4(%arg0: i32, %arg1: i32) -> (i32, i32) {
    %c0_i32 = arith.constant 0 : i32
    %c0_i32_0 = arith.constant 0 : i32
    %c0_i32_1 = arith.constant 0 : i32
    return %c0_i32, %c0_i32_0 : i32, i32
  }
  func.func @transform_5(%arg0: i32, %arg1: i32) -> (i32, i32, i32) {
    %c0_i32 = arith.constant 0 : i32
    %c0_i32_0 = arith.constant 0 : i32
    return %arg0, %arg1, %c0_i32 : i32, i32, i32
  }
}

</mosaic_0001>

<llo_original>
// kernel: tpu_custom_call.1
$region0: #{tpu_custom_call.1}
  #allocation0 [shape = 'u32[]', space=smem, size = 0x4, offset = 0x4, fixed_abs, tag = 'smem constant byte address 0x4 - core index']
  #allocation1 [shape = 'u32[72,128]{1,0:T(1,128)}', space=vmem, size = 0x9000, scoped, tag = 'internal scratch']
  %s0 = inlined_call_operand.hbm [shape: bf16[2,16,64], index: 0, kind: input, shape index: {}]
  %s1 = inlined_call_operand.vmem [shape: bf16[24,16], index: 1, kind: input, shape index: {}]
  %s2 = inlined_call_operand.vmem [shape: f32[24,1], index: 2, kind: input, shape index: {}]
  %s3 = inlined_call_operand.vmem [shape: bf16[64,128], index: 3, kind: input, shape index: {}]
  %s4 = inlined_call_operand.hbm [shape: bf16[128,256], index: 4, kind: input, shape index: {}]
  %s5 = inlined_call_operand.hbm [shape: f32[2,24,256], index: 5, kind: output, shape index: {}]
  %s6 = sld [smem:[#allocation0]]
  $region61: #{tpu_custom_call.1} parent=0
    _
  %s8 = ssub.s32 1, %s6
  %s9 = scalar_select 0, %s8, %s6
  $region1: #{tpu_custom_call.1} parent=0
    #allocation2 [shape = 'u8[8192]{0}', space=vmem, size = 0x2000, scoped, tag = 'input window, operand 0']
    #allocation3 [shape = 's32[2]{0}', space=sflag, size = 0x8, scoped, tag = 'scoped memory for tpu_custom_call.1']
    #allocation4 [shape = 's32[2]{0}', space=sflag, size = 0x8, scoped, tag = 'scoped memory for tpu_custom_call.1']
    #allocation5 [shape = 'u8[65536]{0}', space=vmem, size = 0x10000, scoped, tag = 'input window, operand 4, single buffered']
    #allocation6 [shape = 's32[1]{0}', space=sflag, size = 0x4, scoped, tag = 'scoped memory for tpu_custom_call.1']
    #allocation7 [shape = 'u8[49152]{0}', space=vmem, size = 0xc000, scoped, tag = 'output window, operand 0']
    %10 = vsyncpa [#allocation3], 0
    %s11 = scalar_lea.sflag [#allocation3], 1
    %12 = vsyncpa %s11, 0
    %13 = vsyncpa [#allocation6], 0
    %14 = vsyncpa [#allocation4], 0
    %s15 = scalar_lea.sflag [#allocation4], 1
    %16 = vsyncpa %s15, 0
    loop: start=0, step=1, limit=4
    $region2: #{tpu_custom_call.1} parent=1 // loop_pre_header
      _
    $region3: #{tpu_custom_call.1} parent=1 // loop_header
      %s18 = sphi 0, %s22
      %p19 = scmp.ge.s32.totalorder %s18, 4
      %s25 = sphi 0, %s37
      %s26 = sphi 0, %s33
      %s27 = sphi 0, %s25
      %s28 = sphi 0, %s26
      %s29 = sphi 0, %s27
      %s30 = sphi 0, %s28
      %s40 = sphi 0, %s42
      %s43 = sphi 0, %s40
      %s44 = sphi 0, %s43
      %s60 = sphi 0, %s44
      %s66 = sphi 0, %s68
      %s69 = sphi 0, %s66
      %s70 = sphi 0, %s69
      %s86 = sphi 0, %s70
      %s92 = sphi 0, %s94
      %s95 = sphi 0, %s92
      %s96 = sphi 0, %s95
      %s112 = sphi 0, %s96
      %s116 = sphi 0, %s116
      %s118 = sphi 0, %s116
      %s119 = sphi 0, %s118
      %s133 = sphi 0, %s119
      %s137 = sphi 0, %s137
      %s139 = sphi 0, %s137
      %s140 = sphi 0, %s139
      %s154 = sphi 0, %s140
      %s162 = sphi 0, %s164
      %s165 = sphi 0, %s162
      %s166 = sphi 0, %s165
      %s182 = sphi 0, %s166
    $region4: #{tpu_custom_call.1} parent=1 // loop_header_branch
      %21 = sbr.rel (%p19) target = $region8
    $region5: #{tpu_custom_call.1} parent=1 // loop_body
      %s23 = ssub.s32 %s18, 1
      %s24 = ssub.s32 %s18, 2
      %s31 = sadd.s32 1, %s26
      %p32 = scmp.ge.s32.totalorder %s31, 1
      %s33 = scalar_select %p32, 0, %s31
      %s34 = sadd.s32 1, %s25
      %s35 = scalar_select %p32, %s34, %s25
      %p36 = scmp.ge.s32.totalorder %s35, 2
      %s37 = scalar_select %p36, 0, %s35
      %s38 = ssub.s32 %s25, %s37
      %p39 = scmp.eq.s32.totalorder %s38, 0
      %s41 = sadd.s32 %s40, 1
      %s42 = scalar_select %p39, %s40, %s41
      %p45 = pneg %p39
      %p46 = scmp.eq.s32.totalorder %s18, 1
      %p47 = por %p45, %p46
      %p48 = scmp.ne.s32.totalorder %s40, %s43
      %p49 = scmp.eq.s32.totalorder %s18, 0
      %p50 = por %p48, %p49
      %p51 = scmp.ne.s32.totalorder %s40, %s43
      %p52 = scmp.eq.s32.totalorder %s23, 1
      %p53 = por %p51, %p52
      %p54 = scmp.ne.s32.totalorder %s43, %s44
      %p55 = scmp.eq.s32.totalorder %s23, 0
      %p56 = por %p54, %p55
      %p57 = scmp.ne.s32.totalorder %s43, %s44
      %p58 = scmp.eq.s32.totalorder %s24, 1
      %p59 = por %p57, %p58
      %p61 = scmp.ne.s32.totalorder %s44, %s60
      %p62 = scmp.eq.s32.totalorder %s24, 0
      %p63 = por %p61, %p62
      %s64 = ssub.s32 %s26, %s33
      %p65 = scmp.eq.s32.totalorder %s64, 0
      %s67 = sadd.s32 %s66, 1
      %s68 = scalar_select %p65, %s66, %s67
      %p71 = pneg %p65
      %p72 = scmp.eq.s32.totalorder %s18, 1
      %p73 = por %p71, %p72
      %p74 = scmp.ne.s32.totalorder %s66, %s69
      %p75 = scmp.eq.s32.totalorder %s18, 0
      %p76 = por %p74, %p75
      %p77 = scmp.ne.s32.totalorder %s66, %s69
      %p78 = scmp.eq.s32.totalorder %s23, 1
      %p79 = por %p77, %p78
      %p80 = scmp.ne.s32.totalorder %s69, %s70
      %p81 = scmp.eq.s32.totalorder %s23, 0
      %p82 = por %p80, %p81
      %p83 = scmp.ne.s32.totalorder %s69, %s70
      %p84 = scmp.eq.s32.totalorder %s24, 1
      %p85 = por %p83, %p84
      %p87 = scmp.ne.s32.totalorder %s70, %s86
      %p88 = scmp.eq.s32.totalorder %s24, 0
      %p89 = por %p87, %p88
      %s90 = ssub.s32 %s26, %s33
      %p91 = scmp.eq.s32.totalorder %s90, 0
      %s93 = sadd.s32 %s92, 1
      %s94 = scalar_select %p91, %s92, %s93
      %p97 = pneg %p91
      %p98 = scmp.eq.s32.totalorder %s18, 1
      %p99 = por %p97, %p98
      %p100 = scmp.ne.s32.totalorder %s92, %s95
      %p101 = scmp.eq.s32.totalorder %s18, 0
      %p102 = por %p100, %p101
      %p103 = scmp.ne.s32.totalorder %s92, %s95
      %p104 = scmp.eq.s32.totalorder %s23, 1
      %p105 = por %p103, %p104
      %p106 = scmp.ne.s32.totalorder %s95, %s96
      %p107 = scmp.eq.s32.totalorder %s23, 0
      %p108 = por %p106, %p107
      %p109 = scmp.ne.s32.totalorder %s95, %s96
      %p110 = scmp.eq.s32.totalorder %s24, 1
      %p111 = por %p109, %p110
      %p113 = scmp.ne.s32.totalorder %s96, %s112
      %p114 = scmp.eq.s32.totalorder %s24, 0
      %p115 = por %p113, %p114
      %s117 = sadd.s32 %s116, 1
      %p120 = scmp.eq.s32.totalorder %s18, 1
      %p121 = scmp.ne.s32.totalorder %s116, %s118
      %p122 = scmp.eq.s32.totalorder %s18, 0
      %p123 = por %p121, %p122
      %p124 = scmp.ne.s32.totalorder %s116, %s118
      %p125 = scmp.eq.s32.totalorder %s23, 1
      %p126 = por %p124, %p125
      %p127 = scmp.ne.s32.totalorder %s118, %s119
      %p128 = scmp.eq.s32.totalorder %s23, 0
      %p129 = por %p127, %p128
      %p130 = scmp.ne.s32.totalorder %s118, %s119
      %p131 = scmp.eq.s32.totalorder %s24, 1
      %p132 = por %p130, %p131
      %p134 = scmp.ne.s32.totalorder %s119, %s133
      %p135 = scmp.eq.s32.totalorder %s24, 0
      %p136 = por %p134, %p135
      %s138 = sadd.s32 %s137, 1
      %p141 = scmp.eq.s32.totalorder %s18, 1
      %p142 = scmp.ne.s32.totalorder %s137, %s139
      %p143 = scmp.eq.s32.totalorder %s18, 0
      %p144 = por %p142, %p143
      %p145 = scmp.ne.s32.totalorder %s137, %s139
      %p146 = scmp.eq.s32.totalorder %s23, 1
      %p147 = por %p145, %p146
      %p148 = scmp.ne.s32.totalorder %s139, %s140
      %p149 = scmp.eq.s32.totalorder %s23, 0
      %p150 = por %p148, %p149
      %p151 = scmp.ne.s32.totalorder %s139, %s140
      %p152 = scmp.eq.s32.totalorder %s24, 1
      %p153 = por %p151, %p152
      %p155 = scmp.ne.s32.totalorder %s140, %s154
      %p156 = scmp.eq.s32.totalorder %s24, 0
      %p157 = por %p155, %p156
      %s158 = ssub.s32 %s25, %s37
      %s159 = ssub.s32 %s26, %s33
      %s160 = sor.u32 %s158, %s159
      %p161 = scmp.eq.s32.totalorder %s160, 0
      %s163 = sadd.s32 %s162, 1
      %s164 = scalar_select %p161, %s162, %s163
      %p167 = pneg %p161
      %p168 = scmp.eq.s32.totalorder %s18, 1
      %p169 = por %p167, %p168
      %p170 = scmp.ne.s32.totalorder %s162, %s165
      %p171 = scmp.eq.s32.totalorder %s18, 0
      %p172 = por %p170, %p171
      %p173 = scmp.ne.s32.totalorder %s162, %s165
      %p174 = scmp.eq.s32.totalorder %s23, 1
      %p175 = por %p173, %p174
      %p176 = scmp.ne.s32.totalorder %s165, %s166
      %p177 = scmp.eq.s32.totalorder %s23, 0
      %p178 = por %p176, %p177
      %p179 = scmp.ne.s32.totalorder %s165, %s166
      %p180 = scmp.eq.s32.totalorder %s24, 1
      %p181 = por %p179, %p180
      %p183 = scmp.ne.s32.totalorder %s166, %s182
      %p184 = scmp.eq.s32.totalorder %s24, 0
      %p185 = por %p183, %p184
      %p186 = scmp.le.s32.totalorder 1, %s18
      %p187 = scmp.lt.s32.totalorder %s18, 3
      %p188 = pnand %p186, %p187
      %p189 = pneg %p188
      // Predicated region
      $region9: #{tpu_custom_call.1} parent=5 // pred_check
        _
      $region10: #{tpu_custom_call.1} parent=5 // pred_check_branch
        %191 = sbr.rel (%p188) target = $region12
      $region11: #{tpu_custom_call.1} parent=5 // pred_region
        %s192 = ssub.s32 %s18, 1
        // Predicated region
        $region13: #{tpu_custom_call.1} parent=11 // pred_check
          %p193 = pneg %p82
        $region14: #{tpu_custom_call.1} parent=11 // pred_check_branch
          %195 = sbr.rel (%p193) target = $region16
        $region15: #{tpu_custom_call.1} parent=11 // pred_region
          %s196 = smul.u32 3, %s28
          %p197 = scmp.lt.s32.totalorder %s196, 2
          %s198 = scalar_select %p197, %s196, 2
          %s199 = smul.addr %s198, 4
          %s200 = scalar_lea.vmem %s1, %s199
          %s201 = smul.u32 3, %s28
        $region16: #{tpu_custom_call.1} parent=11 // pred_fallthru
          _
        // Predicated region
        $region17: #{tpu_custom_call.1} parent=11 // pred_check
          %p202 = pneg %p108
        $region18: #{tpu_custom_call.1} parent=11 // pred_check_branch
          %204 = sbr.rel (%p202) target = $region20
        $region19: #{tpu_custom_call.1} parent=11 // pred_region
          %s205 = smul.u32 3, %s28
          %p206 = scmp.lt.s32.totalorder %s205, 2
          %s207 = scalar_select %p206, %s205, 2
          %s208 = smul.addr %s207, 8
          %s209 = scalar_lea.vmem %s2, %s208
          %s210 = smul.u32 3, %s28
        $region20: #{tpu_custom_call.1} parent=11 // pred_fallthru
          _
        // Predicated region
        $region21: #{tpu_custom_call.1} parent=11 // pred_check
          %p211 = pneg %p129
        $region22: #{tpu_custom_call.1} parent=11 // pred_check_branch
          %213 = sbr.rel (%p211) target = $region24
        $region23: #{tpu_custom_call.1} parent=11 // pred_region
          _
        $region24: #{tpu_custom_call.1} parent=11 // pred_fallthru
          _
        // Predicated region
        $region25: #{tpu_custom_call.1} parent=11 // pred_check
          %p214 = pneg %p150
        $region26: #{tpu_custom_call.1} parent=11 // pred_check_branch
          %216 = sbr.rel (%p214) target = $region28
        $region27: #{tpu_custom_call.1} parent=11 // pred_region
          %218 = vsyncadd [#allocation6], 0
          %s219 = sshll.u32 %s4, 4
          %s220 = int_to_ptr.hbm [resolvable:$true] %s219
          %s221 = sshll.u32 [#allocation5], 4
          %s222 = int_to_ptr.vmem [resolvable:$true] %s221
          %227 = dma.hbm_to_vmem [thread:$0]  %s220, 2048, %s222, [#allocation6], 128, 128, 8
        $region28: #{tpu_custom_call.1} parent=11 // pred_fallthru
          _
      $region12: #{tpu_custom_call.1} parent=5 // pred_fallthru
        _
      %p228 = scmp.lt.s32.totalorder %s18, 2
      // Predicated region
      $region29: #{tpu_custom_call.1} parent=5 // pred_check
        %p229 = pneg %p228
      $region30: #{tpu_custom_call.1} parent=5 // pred_check_branch
        %231 = sbr.rel (%p229) target = $region32
      $region31: #{tpu_custom_call.1} parent=5 // pred_region
        // Predicated region
        $region33: #{tpu_custom_call.1} parent=31 // pred_check
          %p232 = pneg %p50
        $region34: #{tpu_custom_call.1} parent=31 // pred_check_branch
          %234 = sbr.rel (%p232) target = $region36
        $region35: #{tpu_custom_call.1} parent=31 // pred_region
          %s235 = sand.u32 %s40, 1
          %s236 = scalar_lea.sflag [#allocation3], %s235
          %s237 = sand.u32 %s40, 1
          %s238 = smul.addr %s237, 8
          %s239 = scalar_lea.vmem [#allocation2], %s238
          %241 = vsyncadd %s236, 0
          %s242 = smul.addr %s25, 2
          %s243 = smul.addr %s242, 4
          %s244 = scalar_lea.hbm %s0, %s243
          %s245 = sshll.u32 %s244, 4
          %s246 = int_to_ptr.hbm [resolvable:$true] %s245
          %s247 = sshll.u32 %s239, 4
          %s248 = int_to_ptr.vmem [resolvable:$true] %s247
          %253 = dma.hbm_to_vmem [thread:$0]  %s246, 128, %s248, %s236, 64, 64, 4
        $region36: #{tpu_custom_call.1} parent=31 // pred_fallthru
          _
      $region32: #{tpu_custom_call.1} parent=5 // pred_fallthru
        _
      %p254 = scmp.le.s32.totalorder 1, %s18
      %p255 = scmp.lt.s32.totalorder %s18, 3
      %p256 = pnand %p254, %p255
      %p257 = pneg %p256
      // Predicated region
      $region37: #{tpu_custom_call.1} parent=5 // pred_check
        _
      $region38: #{tpu_custom_call.1} parent=5 // pred_check_branch
        %259 = sbr.rel (%p256) target = $region40
      $region39: #{tpu_custom_call.1} parent=5 // pred_region
        %s260 = ssub.s32 %s18, 1
        %s261 = sand.u32 %s43, 1
        %s262 = scalar_lea.sflag [#allocation3], %s261
        %s263 = sand.u32 %s43, 1
        %s264 = smul.addr %s263, 8
        %s265 = scalar_lea.vmem [#allocation2], %s264
        // Predicated region
        $region41: #{tpu_custom_call.1} parent=39 // pred_check
          %p266 = pneg %p56
        $region42: #{tpu_custom_call.1} parent=39 // pred_check_branch
          %268 = sbr.rel (%p266) target = $region44
        $region43: #{tpu_custom_call.1} parent=39 // pred_region
          %270 = dma.done %s262, 128
        $region44: #{tpu_custom_call.1} parent=39 // pred_fallthru
          _
        // Predicated region
        $region45: #{tpu_custom_call.1} parent=39 // pred_check
          %p271 = pneg %p150
        $region46: #{tpu_custom_call.1} parent=39 // pred_check_branch
          %273 = sbr.rel (%p271) target = $region48
        $region47: #{tpu_custom_call.1} parent=39 // pred_region
          %275 = dma.done [#allocation6], 2048
        $region48: #{tpu_custom_call.1} parent=39 // pred_fallthru
          _
        %s276 = sand.u32 %s43, 1
        %s277 = scalar_lea.sflag [#allocation3], %s276
        %s278 = sand.u32 %s43, 1
        %s279 = smul.addr %s278, 8
        %s280 = scalar_lea.vmem [#allocation2], %s279
        %p281 = pneg %p56
        %p282 = pneg %p53
        %s283 = smul.u32 3, %s28
        %p284 = scmp.lt.s32.totalorder %s283, 2
        %s285 = scalar_select %p284, %s283, 2
        %s286 = smul.addr %s285, 4
        %s287 = scalar_lea.vmem %s1, %s286
        %p288 = pneg %p82
        %p289 = pneg %p79
        %s290 = smul.u32 3, %s28
        %p291 = scmp.lt.s32.totalorder %s290, 2
        %s292 = scalar_select %p291, %s290, 2
        %s293 = smul.addr %s292, 8
        %s294 = scalar_lea.vmem %s2, %s293
        %p295 = pneg %p108
        %p296 = pneg %p105
        %p297 = pneg %p129
        %p298 = pneg %p126
        %p299 = pneg %p150
        %p300 = pneg %p147
        %p301 = pneg %p178
        %p302 = pneg %p175
        %s303 = sand.u32 %s165, 1
        %s304 = scalar_lea.sflag [#allocation4], %s303
        %s305 = sand.u32 %s165, 1
        %s306 = smul.addr %s305, 48
        %s307 = scalar_lea.vmem [#allocation7], %s306
        %s308 = smul.u32 3, %s28
        %p309 = scmp.lt.s32.totalorder %s308, 2
        %s310 = scalar_select %p309, %s308, 2
        %s311 = smul.addr %s310, 4
        %s312 = scalar_lea.vmem %s1, %s311
        %s313 = smul.u32 3, %s28
        %s314 = smul.u32 3, %s28
        %p315 = scmp.lt.s32.totalorder %s314, 2
        %s316 = scalar_select %p315, %s314, 2
        %s317 = smul.addr %s316, 8
        %s318 = scalar_lea.vmem %s2, %s317
        %s319 = smul.u32 3, %s28
        %s320 = smul.u32 3, %s28
        %v322 = vld [vmem:[%s312] sm:$0xf]
        %v323 = vld [vmem:[%s312 + $0x4] sm:$0xf]
        %v324 = vld [vmem:[%s312 + $0x8] sm:$0xf]
        %v325 = vld [vmem:[%s265] sm:$0xf]
        %v326 = vld [vmem:[%s265 + $0x4] sm:$0xf]
        %v327 = vld [vmem:[%s318] sm:$0xff]
        %v328 = vld [vmem:[%s318 + $0x8] sm:$0xff]
        %v329 = vld [vmem:[%s318 + $0x10] sm:$0xff]
        %331 = vset.pattern.permute.xlu0 0
        %332 = vperm.xlu0 %331, %v327
        %v333 = vpop.permute.xlu0 %332
        %336 = vset.pattern.permute.xlu0 0
        %337 = vperm.xlu0 %336, %v328
        %v338 = vpop.permute.xlu0 %337
        %341 = vset.pattern.permute.xlu0 0
        %342 = vperm.xlu0 %341, %v329
        %v343 = vpop.permute.xlu0 %342
        %v348 = vunpack.c.l.b16 %v322
        %v349 = vunpack.c.l.b16 %v323
        %v350 = vunpack.c.l.b16 %v324
        %v351 = vpack.c.b16 %v349, %v348
        %v352 = vpack.c.b16 %v350, %v350
        %v355 = vunpack.c.l.b16 %v325
        %v356 = vunpack.c.l.b16 %v326
        %v357 = vpack.c.b16 %v356, %v355
        %vm359 = vcmask 130048
        %v361 = vsel %vm359, %v351, 0
        %v364 = vsel %vm359, %v352, 0
        %366 = vmatpush.bf16.msra.mxu0 0
        %367 = vmatpush.bf16.msra.mxu0 0
        %368 = vmatpush.bf16.msra.mxu0 0
        %369 = vmatpush.bf16.msra.mxu0 0
        %370 = vmatpush.bf16.msra.mxu0 0
        %371 = vmatpush.bf16.msra.mxu0 0
        %372 = vmatpush.bf16.msra.mxu0 0
        %373 = vmatpush.bf16.msra.mxu0 %v357
        %374 = vmatmul.bf16.gmra.mxu0 %v361
        %v375 = vpop.f32.mrf.mxu0
        %v376 = vadd.f32 %v333, %v375
        %v377 = vpop.f32.mrf.mxu0
        %v378 = vadd.f32 %v338, %v377
        %379 = vmatmul.bf16.gmra.mxu0 %v364
        %v380 = vpop.f32.mrf.mxu0
        %v381 = vadd.f32 %v343, %v380
        %v382 = vpop.f32.mrf.mxu0
        %383 = vdwg.mxu0
        %v384 = vpack.c.bf16 %v378, %v376
        %v385 = vpack.c.bf16 %v381, %v381
        %v386 = vld [vmem:[%s3] sm:$0xf]
        %v387 = vld [vmem:[%s3 + $0x4] sm:$0xf]
        %v388 = vld [vmem:[%s3 + $0x8] sm:$0xf]
        %v389 = vld [vmem:[%s3 + $0xc] sm:$0xf]
        %v390 = vld [vmem:[%s3 + $0x10] sm:$0xf]
        %v391 = vld [vmem:[%s3 + $0x14] sm:$0xf]
        %v392 = vld [vmem:[%s3 + $0x18] sm:$0xf]
        %v393 = vld [vmem:[%s3 + $0x1c] sm:$0xf]
        %v402 = vunpack.c.l.b16 %v386
        %v403 = vunpack.c.l.b16 %v387
        %v404 = vunpack.c.l.b16 %v388
        %v405 = vunpack.c.l.b16 %v389
        %v406 = vunpack.c.l.b16 %v390
        %v407 = vunpack.c.l.b16 %v391
        %v408 = vunpack.c.l.b16 %v392
        %v409 = vunpack.c.l.b16 %v393
        %v410 = vpack.c.b16 %v403, %v402
        %v411 = vpack.c.b16 %v405, %v404
        %v412 = vpack.c.b16 %v407, %v406
        %v413 = vpack.c.b16 %v409, %v408
        %vm418 = vcmask 523264
        %v420 = vsel %vm418, %v384, 0
        %v423 = vsel %vm418, %v385, 0
        %425 = vmatpush.bf16.msra.mxu0 0
        %426 = vmatpush.bf16.msra.mxu0 0
        %427 = vmatpush.bf16.msra.mxu0 0
        %428 = vmatpush.bf16.msra.mxu0 0
        %429 = vmatpush.bf16.msra.mxu0 %v413
        %430 = vmatpush.bf16.msra.mxu0 %v412
        %431 = vmatpush.bf16.msra.mxu0 %v411
        %432 = vmatpush.bf16.msra.mxu0 %v410
        %433 = vmatmul.bf16.gmra.mxu0 %v420
        %v434 = vpop.f32.mrf.mxu0
        %v435 = vadd.f32 0.0, %v434
        %v436 = vpop.f32.mrf.mxu0
        %v437 = vadd.f32 0.0, %v436
        %438 = vmatmul.bf16.gmra.mxu0 %v423
        %v439 = vpop.f32.mrf.mxu0
        %v440 = vadd.f32 0.0, %v439
        %v441 = vpop.f32.mrf.mxu0
        %442 = vdwg.mxu0
        %v443 = vpack.c.bf16 %v437, %v435
        %v444 = vpack.c.bf16 %v440, %v440
        %v445 = vld [vmem:[#allocation5] sm:$0xff]
        %v446 = vld [vmem:[#allocation5 + $0x8] sm:$0xff]
        %v447 = vld [vmem:[#allocation5 + $0x10] sm:$0xff]
        %v448 = vld [vmem:[#allocation5 + $0x18] sm:$0xff]
        %v449 = vld [vmem:[#allocation5 + $0x20] sm:$0xff]
        %v450 = vld [vmem:[#allocation5 + $0x28] sm:$0xff]
        %v451 = vld [vmem:[#allocation5 + $0x30] sm:$0xff]
        %v452 = vld [vmem:[#allocation5 + $0x38] sm:$0xff]
        %v453 = vld [vmem:[#allocation5 + $0x40] sm:$0xff]
        %v454 = vld [vmem:[#allocation5 + $0x48] sm:$0xff]
        %v455 = vld [vmem:[#allocation5 + $0x50] sm:$0xff]
        %v456 = vld [vmem:[#allocation5 + $0x58] sm:$0xff]
        %v457 = vld [vmem:[#allocation5 + $0x60] sm:$0xff]
        %v458 = vld [vmem:[#allocation5 + $0x68] sm:$0xff]
        %v459 = vld [vmem:[#allocation5 + $0x70] sm:$0xff]
        %v460 = vld [vmem:[#allocation5 + $0x78] sm:$0xff]
        %v477 = vunpack.c.l.b16 %v445
        %v478 = vunpack.c.h.b16 %v445
        %v479 = vunpack.c.l.b16 %v446
        %v480 = vunpack.c.h.b16 %v446
        %v481 = vunpack.c.l.b16 %v447
        %v482 = vunpack.c.h.b16 %v447
        %v483 = vunpack.c.l.b16 %v448
        %v484 = vunpack.c.h.b16 %v448
        %v485 = vunpack.c.l.b16 %v449
        %v486 = vunpack.c.h.b16 %v449
        %v487 = vunpack.c.l.b16 %v450
        %v488 = vunpack.c.h.b16 %v450
        %v489 = vunpack.c.l.b16 %v451
        %v490 = vunpack.c.h.b16 %v451
        %v491 = vunpack.c.l.b16 %v452
        %v492 = vunpack.c.h.b16 %v452
        %v493 = vunpack.c.l.b16 %v453
        %v494 = vunpack.c.h.b16 %v453
        %v495 = vunpack.c.l.b16 %v454
        %v496 = vunpack.c.h.b16 %v454
        %v497 = vunpack.c.l.b16 %v455
        %v498 = vunpack.c.h.b16 %v455
        %v499 = vunpack.c.l.b16 %v456
        %v500 = vunpack.c.h.b16 %v456
        %v501 = vunpack.c.l.b16 %v457
        %v502 = vunpack.c.h.b16 %v457
        %v503 = vunpack.c.l.b16 %v458
        %v504 = vunpack.c.h.b16 %v458
        %v505 = vunpack.c.l.b16 %v459
        %v506 = vunpack.c.h.b16 %v459
        %v507 = vunpack.c.l.b16 %v460
        %v508 = vunpack.c.h.b16 %v460
        %v509 = vpack.c.b16 %v479, %v477
        %v510 = vpack.c.b16 %v480, %v478
        %v511 = vpack.c.b16 %v483, %v481
        %v512 = vpack.c.b16 %v484, %v482
        %v513 = vpack.c.b16 %v487, %v485
        %v514 = vpack.c.b16 %v488, %v486
        %v515 = vpack.c.b16 %v491, %v489
        %v516 = vpack.c.b16 %v492, %v490
        %v517 = vpack.c.b16 %v495, %v493
        %v518 = vpack.c.b16 %v496, %v494
        %v519 = vpack.c.b16 %v499, %v497
        %v520 = vpack.c.b16 %v500, %v498
        %v521 = vpack.c.b16 %v503, %v501
        %v522 = vpack.c.b16 %v504, %v502
        %v523 = vpack.c.b16 %v507, %v505
        %v524 = vpack.c.b16 %v508, %v506
        %541 = vmatpush.bf16.msra.mxu0 %v523
        %542 = vmatpush.bf16.msra.mxu0 %v521
        %543 = vmatpush.bf16.msra.mxu0 %v519
        %544 = vmatpush.bf16.msra.mxu0 %v517
        %545 = vmatpush.bf16.msra.mxu0 %v515
        %546 = vmatpush.bf16.msra.mxu0 %v513
        %547 = vmatpush.bf16.msra.mxu0 %v511
        %548 = vmatpush.bf16.msra.mxu0 %v509
        %549 = vmatmul.bf16.gmra.mxu0 %v443
        %v550 = vpop.f32.mrf.mxu0
        %v551 = vadd.f32 0.0, %v550
        %v552 = vpop.f32.mrf.mxu0
        %v553 = vadd.f32 0.0, %v552
        %554 = vmatmul.bf16.gmra.mxu0 %v444
        %v555 = vpop.f32.mrf.mxu0
        %v556 = vadd.f32 0.0, %v555
        %v557 = vpop.f32.mrf.mxu0
        %558 = vdwg.mxu0
        %559 = vmatpush.bf16.msra.mxu0 %v524
        %560 = vmatpush.bf16.msra.mxu0 %v522
        %561 = vmatpush.bf16.msra.mxu0 %v520
        %562 = vmatpush.bf16.msra.mxu0 %v518
        %563 = vmatpush.bf16.msra.mxu0 %v516
        %564 = vmatpush.bf16.msra.mxu0 %v514
        %565 = vmatpush.bf16.msra.mxu0 %v512
        %566 = vmatpush.bf16.msra.mxu0 %v510
        %567 = vmatmul.bf16.gmra.mxu0 %v443
        %v568 = vpop.f32.mrf.mxu0
        %v569 = vadd.f32 0.0, %v568
        %v570 = vpop.f32.mrf.mxu0
        %v571 = vadd.f32 0.0, %v570
        %572 = vmatmul.bf16.gmra.mxu0 %v444
        %v573 = vpop.f32.mrf.mxu0
        %v574 = vadd.f32 0.0, %v573
        %v575 = vpop.f32.mrf.mxu0
        %576 = vdwg.mxu0
        %v577 = vmul.f32 %v551, 0.5
        %v578 = vmul.f32 %v569, 0.5
        %v579 = vmul.f32 %v553, 0.5
        %v580 = vmul.f32 %v571, 0.5
        %v581 = vmul.f32 %v556, 0.5
        %v582 = vmul.f32 %v574, 0.5
        %v583 = vtanh.pop %v577
        %v584 = vtanh.pop %v578
        %v585 = vtanh.pop %v579
        %v586 = vtanh.pop %v580
        %v587 = vtanh.pop %v581
        %v588 = vtanh.pop %v582
        %v589 = vmul.f32 %v583, 0.5
        %v590 = vmul.f32 %v584, 0.5
        %v591 = vmul.f32 %v585, 0.5
        %v592 = vmul.f32 %v586, 0.5
        %v593 = vmul.f32 %v587, 0.5
        %v594 = vmul.f32 %v588, 0.5
        %v595 = vadd.f32 %v589, 0.5
        %v596 = vadd.f32 %v590, 0.5
        %v597 = vadd.f32 %v591, 0.5
        %v598 = vadd.f32 %v592, 0.5
        %v599 = vadd.f32 %v593, 0.5
        %v600 = vadd.f32 %v594, 0.5
        %601 = vst [vmem:[%s307] sm:$0xff] %v595
        %602 = vst [vmem:[%s307 + $0x8] sm:$0xff] %v596
        %603 = vst [vmem:[%s307 + $0x10] sm:$0xff] %v597
        %604 = vst [vmem:[%s307 + $0x18] sm:$0xff] %v598
        %605 = vst [vmem:[%s307 + $0x20] sm:$0xff] %v599
        %606 = vst [vmem:[%s307 + $0x28] sm:$0xff] %v600
        %s607 = sand.u32 %s165, 1
        %s608 = scalar_lea.sflag [#allocation4], %s607
        %s609 = sand.u32 %s165, 1
        %s610 = smul.addr %s609, 48
        %s611 = scalar_lea.vmem [#allocation7], %s610
        // Predicated region
        $region49: #{tpu_custom_call.1} parent=39 // pred_check
          %p612 = pneg %p175
        $region50: #{tpu_custom_call.1} parent=39 // pred_check_branch
          %614 = sbr.rel (%p612) target = $region52
        $region51: #{tpu_custom_call.1} parent=39 // pred_region
          %s615 = smul.u32 3, %s28
          %617 = vsyncadd %s608, 0
          %s618 = smul.addr %s615, 2
          %s619 = smul.addr %s27, 6
          %s620 = sadd.s32 %s618, %s619
          %s621 = smul.addr %s620, 8
          %s622 = scalar_lea.hbm %s5, %s621
          %s623 = sshll.u32 %s611, 4
          %s624 = int_to_ptr.vmem [resolvable:$true] %s623
          %s625 = sshll.u32 %s622, 4
          %s626 = int_to_ptr.hbm [resolvable:$true] %s625
          %631 = dma.vmem_to_hbm [thread:$0]  %s624, 768, %s626, %s608, 256, 256, 16
        $region52: #{tpu_custom_call.1} parent=39 // pred_fallthru
          _
      $region40: #{tpu_custom_call.1} parent=5 // pred_fallthru
        _
      %p632 = scmp.le.s32.totalorder 2, %s18
      // Predicated region
      $region53: #{tpu_custom_call.1} parent=5 // pred_check
        %p633 = pneg %p632
      $region54: #{tpu_custom_call.1} parent=5 // pred_check_branch
        %635 = sbr.rel (%p633) target = $region56
      $region55: #{tpu_custom_call.1} parent=5 // pred_region
        %s636 = ssub.s32 %s18, 2
        // Predicated region
        $region57: #{tpu_custom_call.1} parent=55 // pred_check
          %p637 = pneg %p181
        $region58: #{tpu_custom_call.1} parent=55 // pred_check_branch
          %639 = sbr.rel (%p637) target = $region60
        $region59: #{tpu_custom_call.1} parent=55 // pred_region
          %s640 = sand.u32 %s166, 1
          %s641 = scalar_lea.sflag [#allocation4], %s640
          %s642 = sand.u32 %s166, 1
          %s643 = smul.addr %s642, 48
          %s644 = scalar_lea.vmem [#allocation7], %s643
          %646 = dma.done %s641, 768
        $region60: #{tpu_custom_call.1} parent=55 // pred_fallthru
          _
      $region56: #{tpu_custom_call.1} parent=5 // pred_fallthru
        _
    $region6: #{tpu_custom_call.1} parent=1 // loop_footer
      %s22 = sadd.s32 1, %s18
    $region7: #{tpu_custom_call.1} parent=1 // loop_footer_branch
      %17 = sbr.rel target = $region3
    $region8: #{tpu_custom_call.1} parent=1 // loop_exit
      _
    %647 = vsyncpa [#allocation3], 1
    %s648 = scalar_lea.sflag [#allocation3], 1
    %649 = vsyncpa %s648, 1
    %650 = vsyncpa [#allocation6], 1
    %651 = vsyncpa [#allocation4], 1
    %s652 = scalar_lea.sflag [#allocation4], 1
    %653 = vsyncpa %s652, 1

</llo_original>
